<compile_context>
chip_gen: v5e
topology: v5e:2x2
jax: 0.10.0
libtpu: 0.0.40
codegen_flags: <defaults>
</compile_context>

<pallas_src>
import functools

import jax
import jax.numpy as jnp
from jax.experimental import pallas as pl
from jax.experimental.pallas import tpu as pltpu


def _round_up(n, m):
    return ((n + m - 1) // m) * m


def _pick_tf(F, tf_req):
    """Largest d_ff tile <= tf_req that divides F and keeps lane alignment."""
    if F <= tf_req:
        return F
    cand = (tf_req // 128) * 128
    while cand >= 128:
        if F % cand == 0:
            return cand
        cand -= 128
    return F  # fall back to whole d_ff (always legal: full-dim block)


def _ff_kernel(x_ref, lnw_ref, w01_ref, wo_ref, o_ref, y_ref, acc_ref,
               *, eps, tf):
    # x_ref:   (tm, D)        lnw_ref: (1, D)
    # w01_ref: (D, 2*tf)      wo_ref:  (tf, D)
    # o_ref:   (tm, D)
    # y_ref:   (tm, D) scratch, weight dtype (RMSNorm output, cached per row tile)
    # acc_ref: (tm, D) scratch, fp32 (wo partial-sum accumulator over F chunks)
    k = pl.program_id(1)

    @pl.when(k == 0)
    def _init():
        # T5 layer norm: no mean subtraction, variance of raw values in fp32.
        xf = x_ref[...].astype(jnp.float32)
        variance = jnp.mean(xf * xf, axis=-1, keepdims=True)
        y = xf * jax.lax.rsqrt(variance + eps)
        y = y * lnw_ref[...].astype(jnp.float32)
        y_ref[...] = y.astype(y_ref.dtype)
        acc_ref[...] = jnp.zeros_like(acc_ref)

    # One fused matmul for both gate and linear projections of this F-chunk.
    gl = jnp.dot(y_ref[...], w01_ref[...], preferred_element_type=jnp.float32)
    g = gl[:, :tf]
    lin = gl[:, tf:]

    # gelu_new: 0.5 * g * (1 + tanh(sqrt(2/pi) * (g + 0.044715 * g^3)))
    # tanh goes to the EUP; reuse g*g to trim VALU work.
    c = 0.7978845608028654  # sqrt(2/pi)
    g2 = g * g
    inner = c * g * (1.0 + 0.044715 * g2)
    h = (0.5 * g * (1.0 + jnp.tanh(inner))) * lin

    # Accumulate this F-chunk's contribution to the output projection.
    # (dropout / intermediate_z are identity/None on this path.)
    acc_ref[...] += jnp.dot(h.astype(wo_ref.dtype), wo_ref[...],
                            preferred_element_type=jnp.float32)

    @pl.when(k == pl.num_programs(1) - 1)
    def _finalize():
        # Residual add (mlp_z / hidden_z None; outer dropout identity in eval).
        o_ref[...] = (x_ref[...].astype(jnp.float32)
                      + acc_ref[...]).astype(o_ref.dtype)


def nash_t5_layer_ff(hidden_states, ln_weight, wi_0, wi_1, wo,
                     *, eps=1e-6, tm=256, tf=512):
    """hidden_states: [B, S, D]; wi_0/wi_1: [F, D]; wo: [D, F] (PyTorch layout)."""
    B, S, D = hidden_states.shape
    F = wi_0.shape[0]
    M = B * S

    # Effective row tile: large by default, clamped + padded so any M works.
    tm_eff = min(tm, _round_up(M, 8))
    M_pad = _round_up(M, tm_eff)

    # Effective d_ff tile (lane aligned, divides F).
    tf_eff = _pick_tf(F, tf)
    n_chunks = F // tf_eff

    x2d = hidden_states.reshape(M, D)
    if M_pad != M:
        # Zero rows normalize to zero and are sliced off afterwards.
        x2d = jnp.pad(x2d, ((0, M_pad - M), (0, 0)))

    # Pre-transpose weights (kernel does plain x @ W) and interleave wi_0 / wi_1
    # per F-chunk so a single (D, 2*tf) block carries both projections.
    w0_t = wi_0.T            # (D, F)
    w1_t = wi_1.T            # (D, F)
    w01 = jnp.concatenate(
        [w0_t.reshape(D, n_chunks, tf_eff),
         w1_t.reshape(D, n_chunks, tf_eff)],
        axis=2,
    ).reshape(D, 2 * F)      # chunk k columns: [w0 chunk k | w1 chunk k]
    wo_t = wo.T              # (F, D)
    lnw = ln_weight.reshape(1, D)

    kernel = functools.partial(_ff_kernel, eps=eps, tf=tf_eff)

    out2d = pl.pallas_call(
        kernel,
        out_shape=jax.ShapeDtypeStruct((M_pad, D), hidden_states.dtype),
        grid_spec=pltpu.PrefetchScalarGridSpec(
            num_scalar_prefetch=0,
            grid=(M_pad // tm_eff, n_chunks),
            in_specs=[
                pl.BlockSpec((tm_eff, D), lambda i, k: (i, 0)),        # x tile
                pl.BlockSpec((1, D), lambda i, k: (0, 0)),             # ln weight
                pl.BlockSpec((D, 2 * tf_eff), lambda i, k: (0, k)),    # [wi_0|wi_1]^T chunk
                pl.BlockSpec((tf_eff, D), lambda i, k: (k, 0)),        # wo^T chunk
            ],
            out_specs=pl.BlockSpec((tm_eff, D), lambda i, k: (i, 0)),
            scratch_shapes=[
                pltpu.VMEM((tm_eff, D), w01.dtype),     # cached RMSNorm output
                pltpu.VMEM((tm_eff, D), jnp.float32),   # fp32 output accumulator
            ],
        ),
        compiler_params=pltpu.CompilerParams(
            dimension_semantics=("parallel", "arbitrary"),
            vmem_limit_bytes=64 * 1024 * 1024,
        ),
    )(x2d, lnw, w01, wo_t)

    return out2d[:M].reshape(B, S, D)


def _reference(hidden_states, ln_weight, wi_0, wi_1, wo, eps=1e-6):
    xf = hidden_states.astype(jnp.float32)
    var = jnp.mean(xf * xf, axis=-1, keepdims=True)
    y = xf * jax.lax.rsqrt(var + eps) * ln_weight
    g = y @ wi_0.T.astype(jnp.float32)
    lin = y @ wi_1.T.astype(jnp.float32)
    c = 0.7978845608028654
    gelu_g = 0.5 * g * (1.0 + jnp.tanh(c * (g + 0.044715 * g ** 3)))
    out = (gelu_g * lin) @ wo.T.astype(jnp.float32)
    return (xf + out).astype(hidden_states.dtype)


if __name__ == "__main__":
    # Small config consistent with the module: d_model=128, d_ff=256, batch=2, seq=8.
    B, S, D, F = 2, 8, 128, 256
    key = jax.random.PRNGKey(0)
    k_x, k0, k1, k2, k_ln = jax.random.split(key, 5)

    hidden_states = jax.random.normal(k_x, (B, S, D), dtype=jnp.float32)
    # PyTorch nn.Linear weight layout: [out_features, in_features].
    wi_0 = jax.random.normal(k0, (F, D), dtype=jnp.float32) * 0.05
    wi_1 = jax.random.normal(k1, (F, D), dtype=jnp.float32) * 0.05
    wo = jax.random.normal(k2, (D, F), dtype=jnp.float32) * 0.05
    ln_weight = jnp.ones((D,), dtype=jnp.float32)  # NashT5LayerNorm init (ones)

    out = nash_t5_layer_ff(hidden_states, ln_weight, wi_0, wi_1, wo, eps=1e-6)
    out = jax.block_until_ready(out)

    ref = _reference(hidden_states, ln_weight, wi_0, wi_1, wo, eps=1e-6)
    assert out.shape == (B, S, D)
    assert jnp.allclose(out, ref, atol=2e-4, rtol=2e-4)

    print("KERNEL_OK")
</pallas_src>

<mosaic_0001>
module attributes {stable_mosaic.version = 11 : i64} {
  func.func @_ff_kernel(%arg0: i32, %arg1: i32, %arg2: memref<16x128xf32, #tpu.memory_space<vmem>>, %arg3: memref<1x128xf32, #tpu.memory_space<vmem>>, %arg4: memref<128x512xf32, #tpu.memory_space<vmem>>, %arg5: memref<256x128xf32, #tpu.memory_space<vmem>>, %arg6: memref<16x128xf32, #tpu.memory_space<vmem>>, %arg7: memref<16x128xf32, #tpu.memory_space<vmem>>, %arg8: memref<16x128xf32, #tpu.memory_space<vmem>>) attributes {dimension_semantics = [#tpu.dimension_semantics<parallel>, #tpu.dimension_semantics<arbitrary>], iteration_bounds = array<i64: 1, 1>, scalar_prefetch = 0 : i64, scratch_operands = 2 : i64, tpu.core_type = #tpu.core_type<tc>, window_params = [{transform_indices = @transform_0, window_bounds = array<i64: 16, 128>}, {pipeline_mode = #tpu.pipeline_mode<synchronous>, transform_indices = @transform_1, window_bounds = array<i64: 1, 128>}, {transform_indices = @transform_2, window_bounds = array<i64: 128, 512>}, {transform_indices = @transform_3, window_bounds = array<i64: 256, 128>}, {transform_indices = @transform_4, window_bounds = array<i64: 16, 128>}]} {
    %c0_i32 = arith.constant 0 : i32
    %0 = arith.cmpi eq, %arg1, %c0_i32 : i32
    %1 = arith.extui %0 : i1 to i32
    %c0_i32_0 = arith.constant 0 : i32
    %2 = arith.cmpi ne, %1, %c0_i32_0 : i32
    scf.if %2 {
      %c0_18 = arith.constant 0 : index
      %c0_19 = arith.constant 0 : index
      %31 = vector.load %arg2[%c0_18, %c0_19] : memref<16x128xf32, #tpu.memory_space<vmem>>, vector<16x128xf32>
      %32 = arith.mulf %31, %31 : vector<16x128xf32>
      %cst_20 = arith.constant dense<0.000000e+00> : vector<16xf32>
      %33 = vector.multi_reduction <add>, %32, %cst_20 [1] : vector<16x128xf32> to vector<16xf32>
      %34 = vector.shape_cast %33 : vector<16xf32> to vector<16x1xf32>
      %cst_21 = arith.constant 1.280000e+02 : f32
      %35 = vector.broadcast %cst_21 : f32 to vector<16x1xf32>
      %36 = arith.divf %34, %35 : vector<16x1xf32>
      %cst_22 = arith.constant 9.99999997E-7 : f32
      %37 = vector.broadcast %cst_22 : f32 to vector<16x1xf32>
      %38 = arith.addf %36, %37 : vector<16x1xf32>
      %39 = math.rsqrt %38 : vector<16x1xf32>
      %40 = vector.broadcast %39 : vector<16x1xf32> to vector<16x128xf32>
      %41 = arith.mulf %31, %40 : vector<16x128xf32>
      %c0_23 = arith.constant 0 : index
      %c0_24 = arith.constant 0 : index
      %42 = vector.load %arg3[%c0_23, %c0_24] : memref<1x128xf32, #tpu.memory_space<vmem>>, vector<1x128xf32>
      %43 = vector.broadcast %42 : vector<1x128xf32> to vector<16x128xf32>
      %44 = arith.mulf %41, %43 : vector<16x128xf32>
      %c0_25 = arith.constant 0 : index
      %c0_26 = arith.constant 0 : index
      %45 = vector.load %arg7[%c0_25, %c0_26] : memref<16x128xf32, #tpu.memory_space<vmem>>, vector<16x128xf32>
      tpu.vector_store %arg7[%c0_25, %c0_26], %44 {strides = array<i32>} : memref<16x128xf32, #tpu.memory_space<vmem>>, vector<16x128xf32>,
      %cst_27 = arith.constant 0.000000e+00 : f32
      %46 = vector.broadcast %cst_27 : f32 to vector<16x128xf32>
      %c0_28 = arith.constant 0 : index
      %c0_29 = arith.constant 0 : index
      %47 = vector.load %arg8[%c0_28, %c0_29] : memref<16x128xf32, #tpu.memory_space<vmem>>, vector<16x128xf32>
      tpu.vector_store %arg8[%c0_28, %c0_29], %46 {strides = array<i32>} : memref<16x128xf32, #tpu.memory_space<vmem>>, vector<16x128xf32>,
    } else {
    }
    %c0 = arith.constant 0 : index
    %c0_1 = arith.constant 0 : index
    %3 = vector.load %arg7[%c0, %c0_1] : memref<16x128xf32, #tpu.memory_space<vmem>>, vector<16x128xf32>
    %c0_2 = arith.constant 0 : index
    %c0_3 = arith.constant 0 : index
    %4 = vector.load %arg4[%c0_2, %c0_3] : memref<128x512xf32, #tpu.memory_space<vmem>>, vector<128x512xf32>
    %cst = arith.constant dense<0.000000e+00> : vector<16x512xf32>
    %5 = tpu.matmul %3, %4, %cst {dimension_numbers = #tpu.dot_dimension_numbers<[1], [0], [0], [1], [0, 0, 1, 1], [], []>} : vector<16x128xf32>, vector<128x512xf32>, vector<16x512xf32> -> vector<16x512xf32>
    %6 = vector.extract_strided_slice %5 {offsets = [0, 0], sizes = [16, 256], strides = [1, 1]} : vector<16x512xf32> to vector<16x256xf32>
    %7 = vector.extract_strided_slice %5 {offsets = [0, 256], sizes = [16, 256], strides = [1, 1]} : vector<16x512xf32> to vector<16x256xf32>
    %8 = arith.mulf %6, %6 : vector<16x256xf32>
    %cst_4 = arith.constant 0.797884583 : f32
    %9 = vector.broadcast %cst_4 : f32 to vector<16x256xf32>
    %10 = arith.mulf %9, %6 : vector<16x256xf32>
    %cst_5 = arith.constant 4.471500e-02 : f32
    %11 = vector.broadcast %cst_5 : f32 to vector<16x256xf32>
    %12 = arith.mulf %11, %8 : vector<16x256xf32>
    %cst_6 = arith.constant 1.000000e+00 : f32
    %13 = vector.broadcast %cst_6 : f32 to vector<16x256xf32>
    %14 = arith.addf %13, %12 : vector<16x256xf32>
    %15 = arith.mulf %10, %14 : vector<16x256xf32>
    %cst_7 = arith.constant 5.000000e-01 : f32
    %16 = vector.broadcast %cst_7 : f32 to vector<16x256xf32>
    %17 = arith.mulf %16, %6 : vector<16x256xf32>
    %18 = math.tanh %15 : vector<16x256xf32>
    %cst_8 = arith.constant 1.000000e+00 : f32
    %19 = vector.broadcast %cst_8 : f32 to vector<16x256xf32>
    %20 = arith.addf %19, %18 : vector<16x256xf32>
    %21 = arith.mulf %17, %20 : vector<16x256xf32>
    %22 = arith.mulf %21, %7 : vector<16x256xf32>
    %c0_9 = arith.constant 0 : index
    %c0_10 = arith.constant 0 : index
    %23 = vector.load %arg8[%c0_9, %c0_10] : memref<16x128xf32, #tpu.memory_space<vmem>>, vector<16x128xf32>
    %c0_11 = arith.constant 0 : index
    %c0_12 = arith.constant 0 : index
    %24 = vector.load %arg5[%c0_11, %c0_12] : memref<256x128xf32, #tpu.memory_space<vmem>>, vector<256x128xf32>
    %cst_13 = arith.constant dense<0.000000e+00> : vector<16x128xf32>
    %25 = tpu.matmul %22, %24, %cst_13 {dimension_numbers = #tpu.dot_dimension_numbers<[1], [0], [0], [1], [0, 0, 1, 1], [], []>} : vector<16x256xf32>, vector<256x128xf32>, vector<16x128xf32> -> vector<16x128xf32>
    %26 = arith.addf %23, %25 : vector<16x128xf32>
    %c0_14 = arith.constant 0 : index
    %c0_15 = arith.constant 0 : index
    %27 = vector.load %arg8[%c0_14, %c0_15] : memref<16x128xf32, #tpu.memory_space<vmem>>, vector<16x128xf32>
    tpu.vector_store %arg8[%c0_14, %c0_15], %26 {strides = array<i32>} : memref<16x128xf32, #tpu.memory_space<vmem>>, vector<16x128xf32>,
    %c0_i32_16 = arith.constant 0 : i32
    %28 = arith.cmpi eq, %arg1, %c0_i32_16 : i32
    %29 = arith.extui %28 : i1 to i32
    %c0_i32_17 = arith.constant 0 : i32
    %30 = arith.cmpi ne, %29, %c0_i32_17 : i32
    scf.if %30 {
      %c0_18 = arith.constant 0 : index
      %c0_19 = arith.constant 0 : index
      %31 = vector.load %arg2[%c0_18, %c0_19] : memref<16x128xf32, #tpu.memory_space<vmem>>, vector<16x128xf32>
      %c0_20 = arith.constant 0 : index
      %c0_21 = arith.constant 0 : index
      %32 = vector.load %arg8[%c0_20, %c0_21] : memref<16x128xf32, #tpu.memory_space<vmem>>, vector<16x128xf32>
      %33 = arith.addf %31, %32 : vector<16x128xf32>
      %c0_22 = arith.constant 0 : index
      %c0_23 = arith.constant 0 : index
      %34 = vector.load %arg6[%c0_22, %c0_23] : memref<16x128xf32, #tpu.memory_space<vmem>>, vector<16x128xf32>
      tpu.vector_store %arg6[%c0_22, %c0_23], %33 {strides = array<i32>} : memref<16x128xf32, #tpu.memory_space<vmem>>, vector<16x128xf32>,
    } else {
    }
    return
  }
  func.func @transform_0(%arg0: i32, %arg1: i32) -> (i32, i32) {
    %c0_i32 = arith.constant 0 : i32
    %c0_i32_0 = arith.constant 0 : i32
    return %arg0, %c0_i32 : i32, i32
  }
  func.func @transform_1(%arg0: i32, %arg1: i32) -> (i32, i32) {
    %c0_i32 = arith.constant 0 : i32
    %c0_i32_0 = arith.constant 0 : i32
    %c0_i32_1 = arith.constant 0 : i32
    return %c0_i32, %c0_i32_0 : i32, i32
  }
  func.func @transform_2(%arg0: i32, %arg1: i32) -> (i32, i32) {
    %c0_i32 = arith.constant 0 : i32
    %c0_i32_0 = arith.constant 0 : i32
    return %c0_i32, %arg1 : i32, i32
  }
  func.func @transform_3(%arg0: i32, %arg1: i32) -> (i32, i32) {
    %c0_i32 = arith.constant 0 : i32
    %c0_i32_0 = arith.constant 0 : i32
    return %arg1, %c0_i32 : i32, i32
  }
  func.func @transform_4(%arg0: i32, %arg1: i32) -> (i32, i32) {
    %c0_i32 = arith.constant 0 : i32
    %c0_i32_0 = arith.constant 0 : i32
    return %arg0, %c0_i32 : i32, i32
  }
}

</mosaic_0001>

<llo_original>
// kernel: tpu_custom_call.1
$region0: #{tpu_custom_call.1}
  #allocation0 [shape = 'u32[]', space=smem, size = 0x4, offset = 0x4, fixed_abs, tag = 'smem constant byte address 0x4 - core index']
  #allocation1 [shape = 'u32[72,128]{1,0:T(1,128)}', space=vmem, size = 0x9000, scoped, tag = 'internal scratch']
  #allocation2 [shape = 'f32[16,128]{1,0:T(8,128)}', space=vmem, size = 0x2000, scoped, tag = 'scratch operand']
  #allocation3 [shape = 'f32[16,128]{1,0:T(8,128)}', space=vmem, size = 0x2000, scoped, tag = 'scratch operand']
  %s0 = inlined_call_operand.hbm [shape: f32[16,128], index: 0, kind: input, shape index: {}]
  %s1 = inlined_call_operand.hbm [shape: f32[1,128], index: 1, kind: input, shape index: {}]
  %s2 = inlined_call_operand.hbm [shape: f32[128,512], index: 2, kind: input, shape index: {}]
  %s3 = inlined_call_operand.hbm [shape: f32[256,128], index: 3, kind: input, shape index: {}]
  %s4 = inlined_call_operand.hbm [shape: f32[16,128], index: 4, kind: output, shape index: {}]
  %s5 = sld [smem:[#allocation0]]
  $region50: #{tpu_custom_call.1} parent=0
    _
  %s7 = ssub.s32 1, %s5
  %s8 = scalar_select 0, %s7, %s5
  $region1: #{tpu_custom_call.1} parent=0
    #allocation4 [shape = 'u8[8192]{0}', space=vmem, size = 0x2000, scoped, tag = 'input window, operand 0, single buffered']
    #allocation5 [shape = 's32[1]{0}', space=sflag, size = 0x4, scoped, tag = 'scoped memory for tpu_custom_call.1']
    #allocation6 [shape = 's32[1]{0}', space=sflag, size = 0x4, scoped, tag = 'scoped memory for tpu_custom_call.1']
    #allocation7 [shape = 'u8[512]{0}', space=vmem, size = 0x400, scoped, tag = 'input window, operand 1, single buffered']
    #allocation8 [shape = 's32[1]{0}', space=sflag, size = 0x4, scoped, tag = 'scoped memory for tpu_custom_call.1']
    #allocation9 [shape = 'u8[262144]{0}', space=vmem, size = 0x40000, scoped, tag = 'input window, operand 2, single buffered']
    #allocation10 [shape = 'u8[131072]{0}', space=vmem, size = 0x20000, scoped, tag = 'input window, operand 3, single buffered']
    #allocation11 [shape = 's32[1]{0}', space=sflag, size = 0x4, scoped, tag = 'scoped memory for tpu_custom_call.1']
    #allocation12 [shape = 'u8[8192]{0}', space=vmem, size = 0x2000, scoped, tag = 'output window, operand 0, single buffered']
    %9 = vsyncpa [#allocation5], 0
    %10 = vsyncpa [#allocation8], 0
    %11 = vsyncpa [#allocation11], 0
    %12 = vsyncpa [#allocation6], 0
    // Predicated region
    $region2: #{tpu_custom_call.1} parent=1 // pred_check
      _
    $region3: #{tpu_custom_call.1} parent=1 // pred_check_branch
      %14 = sbr.rel (0) target = $region5
    $region4: #{tpu_custom_call.1} parent=1 // pred_region
      %16 = vsyncadd [#allocation5], 0
      %s17 = sshll.u32 %s0, 4
      %s18 = int_to_ptr.hbm [resolvable:$true] %s17
      %s19 = sshll.u32 [#allocation4], 4
      %s20 = int_to_ptr.vmem [resolvable:$true] %s19
      %25 = dma.hbm_to_vmem [thread:$0]  %s18, 256, %s20, [#allocation5], 128, 128, 8
    $region5: #{tpu_custom_call.1} parent=1 // pred_fallthru
      _
    // Predicated region
    $region6: #{tpu_custom_call.1} parent=1 // pred_check
      _
    $region7: #{tpu_custom_call.1} parent=1 // pred_check_branch
      %27 = sbr.rel (0) target = $region9
    $region8: #{tpu_custom_call.1} parent=1 // pred_region
      %29 = vsyncadd [#allocation8], 0
      %s31 = sshll.u32 %s1, 4
      %s32 = int_to_ptr.hbm [resolvable:$true] %s31
      %s33 = sshll.u32 [#allocation7], 4
      %s34 = int_to_ptr.vmem [resolvable:$true] %s33
      %36 = dma.hbm_to_vmem [thread:$0]  %s32, 16, %s34, [#allocation8]
    $region9: #{tpu_custom_call.1} parent=1 // pred_fallthru
      _
    // Predicated region
    $region10: #{tpu_custom_call.1} parent=1 // pred_check
      _
    $region11: #{tpu_custom_call.1} parent=1 // pred_check_branch
      %38 = sbr.rel (0) target = $region13
    $region12: #{tpu_custom_call.1} parent=1 // pred_region
      %40 = vsyncadd [#allocation8], 0
      %s41 = sshll.u32 %s2, 4
      %s42 = int_to_ptr.hbm [resolvable:$true] %s41
      %s43 = sshll.u32 [#allocation9], 4
      %s44 = int_to_ptr.vmem [resolvable:$true] %s43
      %49 = dma.hbm_to_vmem [thread:$0]  %s42, 8192, %s44, [#allocation8], 512, 512, 32
    $region13: #{tpu_custom_call.1} parent=1 // pred_fallthru
      _
    // Predicated region
    $region14: #{tpu_custom_call.1} parent=1 // pred_check
      _
    $region15: #{tpu_custom_call.1} parent=1 // pred_check_branch
      %51 = sbr.rel (0) target = $region17
    $region16: #{tpu_custom_call.1} parent=1 // pred_region
      %53 = vsyncadd [#allocation11], 0
      %s54 = sshll.u32 %s3, 4
      %s55 = int_to_ptr.hbm [resolvable:$true] %s54
      %s56 = sshll.u32 [#allocation10], 4
      %s57 = int_to_ptr.vmem [resolvable:$true] %s56
      %62 = dma.hbm_to_vmem [thread:$0]  %s55, 4096, %s57, [#allocation11], 128, 128, 8
    $region17: #{tpu_custom_call.1} parent=1 // pred_fallthru
      _
    // Predicated region
    $region18: #{tpu_custom_call.1} parent=1 // pred_check
      _
    $region19: #{tpu_custom_call.1} parent=1 // pred_check_branch
      %64 = sbr.rel (0) target = $region21
    $region20: #{tpu_custom_call.1} parent=1 // pred_region
      %66 = dma.done [#allocation5], 256
    $region21: #{tpu_custom_call.1} parent=1 // pred_fallthru
      _
    // Predicated region
    $region22: #{tpu_custom_call.1} parent=1 // pred_check
      _
    $region23: #{tpu_custom_call.1} parent=1 // pred_check_branch
      %68 = sbr.rel (0) target = $region25
    $region24: #{tpu_custom_call.1} parent=1 // pred_region
      %70 = dma.done [#allocation8], 16
    $region25: #{tpu_custom_call.1} parent=1 // pred_fallthru
      _
    // Predicated region
    $region26: #{tpu_custom_call.1} parent=1 // pred_check
      _
    $region27: #{tpu_custom_call.1} parent=1 // pred_check_branch
      %72 = sbr.rel (0) target = $region29
    $region28: #{tpu_custom_call.1} parent=1 // pred_region
      %74 = dma.done [#allocation8], 8192
    $region29: #{tpu_custom_call.1} parent=1 // pred_fallthru
      _
    // Predicated region
    $region30: #{tpu_custom_call.1} parent=1 // pred_check
      _
    $region31: #{tpu_custom_call.1} parent=1 // pred_check_branch
      %76 = sbr.rel (0) target = $region33
    $region32: #{tpu_custom_call.1} parent=1 // pred_region
      %78 = dma.done [#allocation11], 4096
    $region33: #{tpu_custom_call.1} parent=1 // pred_fallthru
      _
    %p79 = scmp.eq.s32.totalorder 0, 0
    // Predicated region
    $region34: #{tpu_custom_call.1} parent=1 // pred_check
      %p80 = pneg %p79
    $region35: #{tpu_custom_call.1} parent=1 // pred_check_branch
      %82 = sbr.rel (%p80) target = $region37
    $region36: #{tpu_custom_call.1} parent=1 // pred_region
      %v83 = vld [vmem:[#allocation4] sm:$0xff]
      %v84 = vld [vmem:[#allocation4 + $0x8] sm:$0xff]
      %v85 = vmul.f32 %v83, %v83
      %v86 = vmul.f32 %v84, %v84
      %87 = vadd.xlane.f32.xlu0 %v85
      %v88 = vpop.xlane.xlu0 %87
      %89 = vadd.xlane.f32.xlu0 %v86
      %v90 = vpop.xlane.xlu0 %89
      %v91 = vrcp.pop 128.0
      %v92 = vmul.f32 128.0, %v91
      %v93 = vsub.f32 1.0, %v92
      %v94 = vmul.f32 %v91, %v93
      %v95 = vadd.f32 %v91, %v94
      %vm96 = vweird.f32 %v91
      %v97 = vsel %vm96, %v91, %v95
      %v98 = vmul.f32 %v88, %v97
      %v99 = vmul.f32 %v90, %v97
      %v100 = vadd.f32 %v98, 1e-06
      %v101 = vadd.f32 %v99, 1e-06
      %v102 = vrsqrt.pop %v100
      %v103 = vmul.f32 %v102, %v100
      %v104 = vmul.f32 %v103, %v102
      %v105 = vmul.f32 0.5, %v104
      %v106 = vsub.f32 1.5, %v105
      %v107 = vmul.f32 %v102, %v106
      %vm108 = vweird.f32 %v100
      %vm109 = vweird.f32 %v102
      %vm110 = vmor %vm108, %vm109
      %v111 = vsel %vm110, %v102, %v107
      %v112 = vrsqrt.pop %v101
      %v113 = vmul.f32 %v112, %v101
      %v114 = vmul.f32 %v113, %v112
      %v115 = vmul.f32 0.5, %v114
      %v116 = vsub.f32 1.5, %v115
      %v117 = vmul.f32 %v112, %v116
      %vm118 = vweird.f32 %v101
      %vm119 = vweird.f32 %v112
      %vm120 = vmor %vm118, %vm119
      %v121 = vsel %vm120, %v112, %v117
      %v122 = vmul.f32 %v83, %v111
      %v123 = vmul.f32 %v84, %v121
      %v124 = vld [vmem:[#allocation7] sm:$0x1]
      %v126 = vperm.slane %v124, 0
      %v128 = vmul.f32 %v122, %v126
      %v129 = vmul.f32 %v123, %v126
      %130 = vst [vmem:[#allocation2] sm:$0xff] %v128
      %131 = vst [vmem:[#allocation2 + $0x8] sm:$0xff] %v129
      %132 = vst [vmem:[#allocation3] sm:$0xff] 0.0
      %133 = vst [vmem:[#allocation3 + $0x8] sm:$0xff] 0.0
    $region37: #{tpu_custom_call.1} parent=1 // pred_fallthru
      _
    %v134 = vld [vmem:[#allocation2] sm:$0xff]
    %v135 = vld [vmem:[#allocation2 + $0x8] sm:$0xff]
    %v136 = vld [vmem:[#allocation9] sm:$0xff]
    %v137 = vld [vmem:[#allocation9 + $0x8] sm:$0xff]
    %v138 = vld [vmem:[#allocation9 + $0x10] sm:$0xff]
    %v139 = vld [vmem:[#allocation9 + $0x18] sm:$0xff]
    %v140 = vld [vmem:[#allocation9 + $0x20] sm:$0xff]
    %v141 = vld [vmem:[#allocation9 + $0x28] sm:$0xff]
    %v142 = vld [vmem:[#allocation9 + $0x30] sm:$0xff]
    %v143 = vld [vmem:[#allocation9 + $0x38] sm:$0xff]
    %v144 = vld [vmem:[#allocation9 + $0x40] sm:$0xff]
    %v145 = vld [vmem:[#allocation9 + $0x48] sm:$0xff]
    %v146 = vld [vmem:[#allocation9 + $0x50] sm:$0xff]
    %v147 = vld [vmem:[#allocation9 + $0x58] sm:$0xff]
    %v148 = vld [vmem:[#allocation9 + $0x60] sm:$0xff]
    %v149 = vld [vmem:[#allocation9 + $0x68] sm:$0xff]
    %v150 = vld [vmem:[#allocation9 + $0x70] sm:$0xff]
    %v151 = vld [vmem:[#allocation9 + $0x78] sm:$0xff]
    %v152 = vld [vmem:[#allocation9 + $0x80] sm:$0xff]
    %v153 = vld [vmem:[#allocation9 + $0x88] sm:$0xff]
    %v154 = vld [vmem:[#allocation9 + $0x90] sm:$0xff]
    %v155 = vld [vmem:[#allocation9 + $0x98] sm:$0xff]
    %v156 = vld [vmem:[#allocation9 + $0xa0] sm:$0xff]
    %v157 = vld [vmem:[#allocation9 + $0xa8] sm:$0xff]
    %v158 = vld [vmem:[#allocation9 + $0xb0] sm:$0xff]
    %v159 = vld [vmem:[#allocation9 + $0xb8] sm:$0xff]
    %v160 = vld [vmem:[#allocation9 + $0xc0] sm:$0xff]
    %v161 = vld [vmem:[#allocation9 + $0xc8] sm:$0xff]
    %v162 = vld [vmem:[#allocation9 + $0xd0] sm:$0xff]
    %v163 = vld [vmem:[#allocation9 + $0xd8] sm:$0xff]
    %v164 = vld [vmem:[#allocation9 + $0xe0] sm:$0xff]
    %v165 = vld [vmem:[#allocation9 + $0xe8] sm:$0xff]
    %v166 = vld [vmem:[#allocation9 + $0xf0] sm:$0xff]
    %v167 = vld [vmem:[#allocation9 + $0xf8] sm:$0xff]
    %v168 = vld [vmem:[#allocation9 + $0x100] sm:$0xff]
    %v169 = vld [vmem:[#allocation9 + $0x108] sm:$0xff]
    %v170 = vld [vmem:[#allocation9 + $0x110] sm:$0xff]
    %v171 = vld [vmem:[#allocation9 + $0x118] sm:$0xff]
    %v172 = vld [vmem:[#allocation9 + $0x120] sm:$0xff]
    %v173 = vld [vmem:[#allocation9 + $0x128] sm:$0xff]
    %v174 = vld [vmem:[#allocation9 + $0x130] sm:$0xff]
    %v175 = vld [vmem:[#allocation9 + $0x138] sm:$0xff]
    %v176 = vld [vmem:[#allocation9 + $0x140] sm:$0xff]
    %v177 = vld [vmem:[#allocation9 + $0x148] sm:$0xff]
    %v178 = vld [vmem:[#allocation9 + $0x150] sm:$0xff]
    %v179 = vld [vmem:[#allocation9 + $0x158] sm:$0xff]
    %v180 = vld [vmem:[#allocation9 + $0x160] sm:$0xff]
    %v181 = vld [vmem:[#allocation9 + $0x168] sm:$0xff]
    %v182 = vld [vmem:[#allocation9 + $0x170] sm:$0xff]
    %v183 = vld [vmem:[#allocation9 + $0x178] sm:$0xff]
    %v184 = vld [vmem:[#allocation9 + $0x180] sm:$0xff]
    %v185 = vld [vmem:[#allocation9 + $0x188] sm:$0xff]
    %v186 = vld [vmem:[#allocation9 + $0x190] sm:$0xff]
    %v187 = vld [vmem:[#allocation9 + $0x198] sm:$0xff]
    %v188 = vld [vmem:[#allocation9 + $0x1a0] sm:$0xff]
    %v189 = vld [vmem:[#allocation9 + $0x1a8] sm:$0xff]
    %v190 = vld [vmem:[#allocation9 + $0x1b0] sm:$0xff]
    %v191 = vld [vmem:[#allocation9 + $0x1b8] sm:$0xff]
    %v192 = vld [vmem:[#allocation9 + $0x1c0] sm:$0xff]
    %v193 = vld [vmem:[#allocation9 + $0x1c8] sm:$0xff]
    %v194 = vld [vmem:[#allocation9 + $0x1d0] sm:$0xff]
    %v195 = vld [vmem:[#allocation9 + $0x1d8] sm:$0xff]
    %v196 = vld [vmem:[#allocation9 + $0x1e0] sm:$0xff]
    %v197 = vld [vmem:[#allocation9 + $0x1e8] sm:$0xff]
    %v198 = vld [vmem:[#allocation9 + $0x1f0] sm:$0xff]
    %v199 = vld [vmem:[#allocation9 + $0x1f8] sm:$0xff]
    %200 = vmatpush.msra.mxu0 %v196
    %201 = vmatpush.msra.mxu0 %v192
    %202 = vmatpush.msra.mxu0 %v188
    %203 = vmatpush.msra.mxu0 %v184
    %204 = vmatpush.msra.mxu0 %v180
    %205 = vmatpush.msra.mxu0 %v176
    %206 = vmatpush.msra.mxu0 %v172
    %207 = vmatpush.msra.mxu0 %v168
    %208 = vmatpush.msra.mxu0 %v164
    %209 = vmatpush.msra.mxu0 %v160
    %210 = vmatpush.msra.mxu0 %v156
    %211 = vmatpush.msra.mxu0 %v152
    %212 = vmatpush.msra.mxu0 %v148
    %213 = vmatpush.msra.mxu0 %v144
    %214 = vmatpush.msra.mxu0 %v140
    %215 = vmatpush.msra.mxu0 %v136
    %216 = vmatmul.f32.gmra.mxu0 %v134
    %v217 = vpop.f32.mrf.mxu0
    %v218 = vadd.f32 0.0, %v217
    %219 = vmatmul.f32.gmra.mxu0 %v135
    %v220 = vpop.f32.mrf.mxu0
    %v221 = vadd.f32 0.0, %v220
    %222 = vdwg.mxu0
    %223 = vmatpush.msra.mxu0 %v197
    %224 = vmatpush.msra.mxu0 %v193
    %225 = vmatpush.msra.mxu0 %v189
    %226 = vmatpush.msra.mxu0 %v185
    %227 = vmatpush.msra.mxu0 %v181
    %228 = vmatpush.msra.mxu0 %v177
    %229 = vmatpush.msra.mxu0 %v173
    %230 = vmatpush.msra.mxu0 %v169
    %231 = vmatpush.msra.mxu0 %v165
    %232 = vmatpush.msra.mxu0 %v161
    %233 = vmatpush.msra.mxu0 %v157
    %234 = vmatpush.msra.mxu0 %v153
    %235 = vmatpush.msra.mxu0 %v149
    %236 = vmatpush.msra.mxu0 %v145
    %237 = vmatpush.msra.mxu0 %v141
    %238 = vmatpush.msra.mxu0 %v137
    %239 = vmatmul.f32.gmra.mxu0 %v134
    %v240 = vpop.f32.mrf.mxu0
    %v241 = vadd.f32 0.0, %v240
    %242 = vmatmul.f32.gmra.mxu0 %v135
    %v243 = vpop.f32.mrf.mxu0
    %v244 = vadd.f32 0.0, %v243
    %245 = vdwg.mxu0
    %246 = vmatpush.msra.mxu0 %v198
    %247 = vmatpush.msra.mxu0 %v194
    %248 = vmatpush.msra.mxu0 %v190
    %249 = vmatpush.msra.mxu0 %v186
    %250 = vmatpush.msra.mxu0 %v182
    %251 = vmatpush.msra.mxu0 %v178
    %252 = vmatpush.msra.mxu0 %v174
    %253 = vmatpush.msra.mxu0 %v170
    %254 = vmatpush.msra.mxu0 %v166
    %255 = vmatpush.msra.mxu0 %v162
    %256 = vmatpush.msra.mxu0 %v158
    %257 = vmatpush.msra.mxu0 %v154
    %258 = vmatpush.msra.mxu0 %v150
    %259 = vmatpush.msra.mxu0 %v146
    %260 = vmatpush.msra.mxu0 %v142
    %261 = vmatpush.msra.mxu0 %v138
    %262 = vmatmul.f32.gmra.mxu0 %v134
    %v263 = vpop.f32.mrf.mxu0
    %v264 = vadd.f32 0.0, %v263
    %265 = vmatmul.f32.gmra.mxu0 %v135
    %v266 = vpop.f32.mrf.mxu0
    %v267 = vadd.f32 0.0, %v266
    %268 = vdwg.mxu0
    %269 = vmatpush.msra.mxu0 %v199
    %270 = vmatpush.msra.mxu0 %v195
    %271 = vmatpush.msra.mxu0 %v191
    %272 = vmatpush.msra.mxu0 %v187
    %273 = vmatpush.msra.mxu0 %v183
    %274 = vmatpush.msra.mxu0 %v179
    %275 = vmatpush.msra.mxu0 %v175
    %276 = vmatpush.msra.mxu0 %v171
    %277 = vmatpush.msra.mxu0 %v167
    %278 = vmatpush.msra.mxu0 %v163
    %279 = vmatpush.msra.mxu0 %v159
    %280 = vmatpush.msra.mxu0 %v155
    %281 = vmatpush.msra.mxu0 %v151
    %282 = vmatpush.msra.mxu0 %v147
    %283 = vmatpush.msra.mxu0 %v143
    %284 = vmatpush.msra.mxu0 %v139
    %285 = vmatmul.f32.gmra.mxu0 %v134
    %v286 = vpop.f32.mrf.mxu0
    %v287 = vadd.f32 0.0, %v286
    %288 = vmatmul.f32.gmra.mxu0 %v135
    %v289 = vpop.f32.mrf.mxu0
    %v290 = vadd.f32 0.0, %v289
    %291 = vdwg.mxu0
    %v292 = vmul.f32 %v218, %v218
    %v293 = vmul.f32 %v241, %v241
    %v294 = vmul.f32 %v221, %v221
    %v295 = vmul.f32 %v244, %v244
    %v296 = vmul.f32 %v218, 0.7978846
    %v297 = vmul.f32 %v241, 0.7978846
    %v298 = vmul.f32 %v221, 0.7978846
    %v299 = vmul.f32 %v244, 0.7978846
    %v300 = vmul.f32 %v292, 0.044715
    %v301 = vmul.f32 %v293, 0.044715
    %v302 = vmul.f32 %v294, 0.044715
    %v303 = vmul.f32 %v295, 0.044715
    %v304 = vadd.f32 %v300, 1.0
    %v305 = vadd.f32 %v301, 1.0
    %v306 = vadd.f32 %v302, 1.0
    %v307 = vadd.f32 %v303, 1.0
    %v308 = vmul.f32 %v296, %v304
    %v309 = vmul.f32 %v297, %v305
    %v310 = vmul.f32 %v298, %v306
    %v311 = vmul.f32 %v299, %v307
    %v312 = vmul.f32 %v218, 0.5
    %v313 = vmul.f32 %v241, 0.5
    %v314 = vmul.f32 %v221, 0.5
    %v315 = vmul.f32 %v244, 0.5
    %v316 = vtanh.pop %v308
    %v317 = vtanh.pop %v309
    %v318 = vtanh.pop %v310
    %v319 = vtanh.pop %v311
    %v320 = vadd.f32 %v316, 1.0
    %v321 = vadd.f32 %v317, 1.0
    %v322 = vadd.f32 %v318, 1.0
    %v323 = vadd.f32 %v319, 1.0
    %v324 = vmul.f32 %v312, %v320
    %v325 = vmul.f32 %v313, %v321
    %v326 = vmul.f32 %v314, %v322
    %v327 = vmul.f32 %v315, %v323
    %v328 = vmul.f32 %v324, %v264
    %v329 = vmul.f32 %v325, %v287
    %v330 = vmul.f32 %v326, %v267
    %v331 = vmul.f32 %v327, %v290
    %v332 = vld [vmem:[#allocation3] sm:$0xff]
    %v333 = vld [vmem:[#allocation3 + $0x8] sm:$0xff]
    %v334 = vld [vmem:[#allocation10] sm:$0xff]
    %v335 = vld [vmem:[#allocation10 + $0x8] sm:$0xff]
    %v336 = vld [vmem:[#allocation10 + $0x10] sm:$0xff]
    %v337 = vld [vmem:[#allocation10 + $0x18] sm:$0xff]
    %v338 = vld [vmem:[#allocation10 + $0x20] sm:$0xff]
    %v339 = vld [vmem:[#allocation10 + $0x28] sm:$0xff]
    %v340 = vld [vmem:[#allocation10 + $0x30] sm:$0xff]
    %v341 = vld [vmem:[#allocation10 + $0x38] sm:$0xff]
    %v342 = vld [vmem:[#allocation10 + $0x40] sm:$0xff]
    %v343 = vld [vmem:[#allocation10 + $0x48] sm:$0xff]
    %v344 = vld [vmem:[#allocation10 + $0x50] sm:$0xff]
    %v345 = vld [vmem:[#allocation10 + $0x58] sm:$0xff]
    %v346 = vld [vmem:[#allocation10 + $0x60] sm:$0xff]
    %v347 = vld [vmem:[#allocation10 + $0x68] sm:$0xff]
    %v348 = vld [vmem:[#allocation10 + $0x70] sm:$0xff]
    %v349 = vld [vmem:[#allocation10 + $0x78] sm:$0xff]
    %v350 = vld [vmem:[#allocation10 + $0x80] sm:$0xff]
    %v351 = vld [vmem:[#allocation10 + $0x88] sm:$0xff]
    %v352 = vld [vmem:[#allocation10 + $0x90] sm:$0xff]
    %v353 = vld [vmem:[#allocation10 + $0x98] sm:$0xff]
    %v354 = vld [vmem:[#allocation10 + $0xa0] sm:$0xff]
    %v355 = vld [vmem:[#allocation10 + $0xa8] sm:$0xff]
    %v356 = vld [vmem:[#allocation10 + $0xb0] sm:$0xff]
    %v357 = vld [vmem:[#allocation10 + $0xb8] sm:$0xff]
    %v358 = vld [vmem:[#allocation10 + $0xc0] sm:$0xff]
    %v359 = vld [vmem:[#allocation10 + $0xc8] sm:$0xff]
    %v360 = vld [vmem:[#allocation10 + $0xd0] sm:$0xff]
    %v361 = vld [vmem:[#allocation10 + $0xd8] sm:$0xff]
    %v362 = vld [vmem:[#allocation10 + $0xe0] sm:$0xff]
    %v363 = vld [vmem:[#allocation10 + $0xe8] sm:$0xff]
    %v364 = vld [vmem:[#allocation10 + $0xf0] sm:$0xff]
    %v365 = vld [vmem:[#allocation10 + $0xf8] sm:$0xff]
    %366 = vmatpush.msra.mxu0 %v349
    %367 = vmatpush.msra.mxu0 %v348
    %368 = vmatpush.msra.mxu0 %v347
    %369 = vmatpush.msra.mxu0 %v346
    %370 = vmatpush.msra.mxu0 %v345
    %371 = vmatpush.msra.mxu0 %v344
    %372 = vmatpush.msra.mxu0 %v343
    %373 = vmatpush.msra.mxu0 %v342
    %374 = vmatpush.msra.mxu0 %v341
    %375 = vmatpush.msra.mxu0 %v340
    %376 = vmatpush.msra.mxu0 %v339
    %377 = vmatpush.msra.mxu0 %v338
    %378 = vmatpush.msra.mxu0 %v337
    %379 = vmatpush.msra.mxu0 %v336
    %380 = vmatpush.msra.mxu0 %v335
    %381 = vmatpush.msra.mxu0 %v334
    %382 = vmatmul.f32.gmra.mxu0 %v328
    %v383 = vpop.f32.mrf.mxu0
    %v384 = vadd.f32 0.0, %v383
    %385 = vmatmul.f32.gmra.mxu0 %v330
    %v386 = vpop.f32.mrf.mxu0
    %v387 = vadd.f32 0.0, %v386
    %388 = vdwg.mxu0
    %389 = vmatpush.msra.mxu0 %v365
    %390 = vmatpush.msra.mxu0 %v364
    %391 = vmatpush.msra.mxu0 %v363
    %392 = vmatpush.msra.mxu0 %v362
    %393 = vmatpush.msra.mxu0 %v361
    %394 = vmatpush.msra.mxu0 %v360
    %395 = vmatpush.msra.mxu0 %v359
    %396 = vmatpush.msra.mxu0 %v358
    %397 = vmatpush.msra.mxu0 %v357
    %398 = vmatpush.msra.mxu0 %v356
    %399 = vmatpush.msra.mxu0 %v355
    %400 = vmatpush.msra.mxu0 %v354
    %401 = vmatpush.msra.mxu0 %v353
    %402 = vmatpush.msra.mxu0 %v352
    %403 = vmatpush.msra.mxu0 %v351
    %404 = vmatpush.msra.mxu0 %v350
    %405 = vmatmul.f32.gmra.mxu0 %v329
    %v406 = vpop.f32.mrf.mxu0
    %v407 = vadd.f32 %v384, %v406
    %408 = vmatmul.f32.gmra.mxu0 %v331
    %v409 = vpop.f32.mrf.mxu0
    %v410 = vadd.f32 %v387, %v409
    %411 = vdwg.mxu0
    %v412 = vadd.f32 %v332, %v407
    %v413 = vadd.f32 %v333, %v410
    %414 = vst [vmem:[#allocation3] sm:$0xff] %v412
    %415 = vst [vmem:[#allocation3 + $0x8] sm:$0xff] %v413
    // Predicated region
    $region38: #{tpu_custom_call.1} parent=1 // pred_check
      %p416 = pneg %p79
    $region39: #{tpu_custom_call.1} parent=1 // pred_check_branch
      %418 = sbr.rel (%p416) target = $region41
    $region40: #{tpu_custom_call.1} parent=1 // pred_region
      %v419 = vld [vmem:[#allocation4] sm:$0xff]
      %v420 = vld [vmem:[#allocation4 + $0x8] sm:$0xff]
      %v421 = vld [vmem:[#allocation3] sm:$0xff]
      %v422 = vld [vmem:[#allocation3 + $0x8] sm:$0xff]
      %v423 = vadd.f32 %v419, %v421
      %v424 = vadd.f32 %v420, %v422
      %425 = vst [vmem:[#allocation12] sm:$0xff] %v423
      %426 = vst [vmem:[#allocation12 + $0x8] sm:$0xff] %v424
    $region41: #{tpu_custom_call.1} parent=1 // pred_fallthru
      _
    // Predicated region
    $region42: #{tpu_custom_call.1} parent=1 // pred_check
      _
    $region43: #{tpu_custom_call.1} parent=1 // pred_check_branch
      %428 = sbr.rel (0) target = $region45
    $region44: #{tpu_custom_call.1} parent=1 // pred_region
      %430 = vsyncadd [#allocation6], 0
      %s431 = sshll.u32 [#allocation12], 4
      %s432 = int_to_ptr.vmem [resolvable:$true] %s431
      %s433 = sshll.u32 %s4, 4
      %s434 = int_to_ptr.hbm [resolvable:$true] %s433
      %439 = dma.vmem_to_hbm [thread:$0]  %s432, 256, %s434, [#allocation6], 128, 128, 8
    $region45: #{tpu_custom_call.1} parent=1 // pred_fallthru
      _
    // Predicated region
    $region46: #{tpu_custom_call.1} parent=1 // pred_check
      _
    $region47: #{tpu_custom_call.1} parent=1 // pred_check_branch
      %441 = sbr.rel (0) target = $region49
    $region48: #{tpu_custom_call.1} parent=1 // pred_region
      %443 = dma.done [#allocation6], 256
    $region49: #{tpu_custom_call.1} parent=1 // pred_fallthru
      _
    %444 = vsyncpa [#allocation5], 1
    %445 = vsyncpa [#allocation8], 1
    %446 = vsyncpa [#allocation11], 1
    %447 = vsyncpa [#allocation6], 1

</llo_original>
